<compile_context>
chip_gen: v7x
topology: tpu7x:2x2x1
jax: 0.10.0
libtpu: 0.0.40
codegen_flags: <defaults>
</compile_context>

<pallas_src>
import math

import jax
import jax.numpy as jnp
from jax.experimental import pallas as pl
from jax.experimental.pallas import tpu as pltpu


def _scale_kernel(x_ref, s_ref, o_ref):
    # x_ref: (tm, tn) tile; s_ref: (1, tn) scale row, broadcast over rows.
    o_ref[...] = x_ref[...] * s_ref[...]


def _round_up(x, m):
    return ((x + m - 1) // m) * m


def _cdiv(a, b):
    return -(-a // b)


def _find_fold(M, D, max_lanes=1024):
    """Largest g>1 s.t. g | M, (D*g) % 128 == 0 and D*g <= max_lanes, else 1."""
    if D % 128 == 0 or M <= 1:
        return 1
    g0 = 128 // math.gcd(D, 128)
    best, g = 1, g0
    while D * g <= max_lanes:
        if M % g == 0:
            best = g
        g += g0
    return best


def _largest_lane_divisor(Dr, cap):
    """Largest tn with tn % 128 == 0, Dr % tn == 0, tn <= cap (Dr % 128 == 0)."""
    k = Dr // 128
    best = 128
    d = 1
    while d * d <= k:
        if k % d == 0:
            for t in (d, k // d):
                tn = 128 * t
                if best < tn <= cap:
                    best = tn
        d += 1
    return best


def scale_forward(x, scale, *, target_tile_bytes=4 << 20,
                  vmem_limit_bytes=48 << 20):
    """x: (..., D) array, scale: (D,) vector. Returns x * scale (in x.dtype)."""
    orig_shape = x.shape
    D = orig_shape[-1]
    assert scale.shape == (D,)
    if x.size == 0:
        return x

    dtype = x.dtype
    itemsize = jnp.dtype(dtype).itemsize
    pack = max(8, 32 // itemsize)  # sublane multiple: f32->8, bf16->16, int8->32
    # NOTE: compute is done in x.dtype (scale downcast first).  For floating
    # inputs this matches the module up to the usual bf16 rounding; integer /
    # quantized inputs would need a dequant-multiply path instead.
    s = scale.astype(dtype)

    M = x.size // D
    x2 = x.reshape(M, D)

    # ---- Lane folding: make the last dim a multiple of 128 when possible ----
    g = _find_fold(M, D)
    if g > 1:
        Mr, Dr = M // g, D * g
        x2 = x2.reshape(Mr, Dr)
        s2 = jnp.tile(s, g).reshape(1, Dr)
    else:
        Mr, Dr = M, D
        s2 = s.reshape(1, D)

    # ---- Pick tn (lane tile) ----
    if Dr % 128 == 0:
        cap = max(128, (target_tile_bytes // (pack * itemsize)) // 128 * 128)
        tn = _largest_lane_divisor(Dr, cap)
        col_blocks = Dr // tn
    else:
        # Non-foldable, non-128-multiple last dim: use the full dim (legal as a
        # full-extent block); stores on the ragged lanes are masked.
        # TODO(synk): for very wide non-128-multiple D, split the lane dim with
        # a cdiv grid + edge masking instead of one full-width block.
        tn = Dr
        col_blocks = 1

    # ---- Pick tm (row tile) from the byte budget ----
    tm_budget = max(pack, (target_tile_bytes // (tn * itemsize)) // pack * pack)

    # Megacore (v7x): make sure big inputs produce >= 2 (pref >= 4) grid blocks.
    total_bytes = Mr * Dr * itemsize
    min_blocks = 4 if total_bytes > (4 << 20) else (2 if total_bytes > (1 << 20) else 1)
    req_row_blocks = _cdiv(min_blocks, col_blocks)
    if req_row_blocks > 1:
        tm_cap = max(pack, _round_up(_cdiv(Mr, req_row_blocks), pack))
        tm_budget = min(tm_budget, tm_cap)

    if tm_budget >= Mr:
        tm = Mr          # single row block; full-extent dim is always legal
    else:
        tm = tm_budget   # multiple of the sublane pack
    row_blocks = _cdiv(Mr, tm)   # ragged last block handled by edge masking

    out = pl.pallas_call(
        _scale_kernel,
        out_shape=jax.ShapeDtypeStruct((Mr, Dr), dtype),
        # Row axis innermost so the scale block (indexed only by the col axis)
        # stays resident across the inner loop.
        grid=(col_blocks, row_blocks),
        in_specs=[
            pl.BlockSpec((tm, tn), lambda j, i: (i, j)),
            pl.BlockSpec((1, tn), lambda j, i: (0, j)),
        ],
        out_specs=pl.BlockSpec((tm, tn), lambda j, i: (i, j)),
        compiler_params=pltpu.CompilerParams(
            dimension_semantics=("parallel", "parallel"),
            vmem_limit_bytes=vmem_limit_bytes,
        ),
    )(x2, s2)

    return out.reshape(orig_shape)


class ScalePallas:
    """Mirror of the PyTorch Scale module (scale = init_value * ones(dim))."""

    def __init__(self, dim, init_value=1.0, dtype=jnp.float32):
        self.scale = init_value * jnp.ones((dim,), dtype=dtype)

    def __call__(self, x, **kw):
        return scale_forward(x, self.scale, **kw)


if __name__ == "__main__":
    key = jax.random.PRNGKey(0)
    k1, k2, k3, k4, k5 = jax.random.split(key, 5)

    # 1) Small shape consistent with the module: batch=2, seq=8, hidden(dim)=32.
    #    Exercises the lane-fold path (32 -> 512 lanes, unmasked stores).
    B, N, D = 2, 8, 32
    x = jax.random.normal(k1, (B, N, D), dtype=jnp.float32)
    mod = ScalePallas(D, init_value=0.5)
    y = jax.block_until_ready(mod(x))
    assert y.shape == x.shape
    assert jnp.allclose(y, x * mod.scale, atol=1e-6, rtol=1e-6)

    # 2) Lane-dense hidden size (divisor-tn path).
    x2 = jax.random.normal(k2, (4, 16, 256), dtype=jnp.float32)
    mod2 = ScalePallas(256, init_value=1.5)
    y2 = jax.block_until_ready(mod2(x2))
    assert jnp.allclose(y2, x2 * mod2.scale, atol=1e-6, rtol=1e-6)

    # 3) Non-divisible row count with small forced tiles: exercises the
    #    no-pad cdiv grid + edge-block masking (26 rows, tm=8 -> 4 blocks).
    x3 = jax.random.normal(k3, (2, 13, 256), dtype=jnp.float32)
    mod3 = ScalePallas(256, init_value=-0.75)
    y3 = jax.block_until_ready(mod3(x3, target_tile_bytes=8 * 256 * 4))
    assert jnp.allclose(y3, x3 * mod3.scale, atol=1e-6, rtol=1e-6)

    # 4) D=96: generalized lcm-based fold (96 -> 768 lanes).
    x4 = jax.random.normal(k4, (2, 8, 96), dtype=jnp.float32)
    mod4 = ScalePallas(96, init_value=2.0)
    y4 = jax.block_until_ready(mod4(x4))
    assert jnp.allclose(y4, x4 * mod4.scale, atol=1e-6, rtol=1e-6)

    # 5) bf16 input (compute in bf16; compare against the same-precision ref).
    x5 = jax.random.normal(k5, (2, 8, 32), dtype=jnp.bfloat16)
    mod5 = ScalePallas(32, init_value=0.25)
    y5 = jax.block_until_ready(mod5(x5))
    assert jnp.allclose(
        y5.astype(jnp.float32),
        (x5 * mod5.scale.astype(jnp.bfloat16)).astype(jnp.float32),
        atol=1e-2, rtol=1e-2,
    )

    print("KERNEL_OK")
</pallas_src>

<mosaic_0001>
module attributes {stable_mosaic.version = 11 : i64} {
  func.func @_scale_kernel(%arg0: i32, %arg1: i32, %arg2: memref<1x512xf32, #tpu.memory_space<vmem>>, %arg3: memref<1x512xf32, #tpu.memory_space<vmem>>, %arg4: memref<1x512xf32, #tpu.memory_space<vmem>>) attributes {dimension_semantics = [#tpu.dimension_semantics<parallel>, #tpu.dimension_semantics<parallel>], iteration_bounds = array<i64: 1, 1>, scalar_prefetch = 0 : i64, scratch_operands = 0 : i64, tpu.core_type = #tpu.core_type<tc>, window_params = [{transform_indices = @transform_0, window_bounds = array<i64: 1, 512>}, {transform_indices = @transform_1, window_bounds = array<i64: 1, 512>}, {transform_indices = @transform_2, window_bounds = array<i64: 1, 512>}]} {
    %c0 = arith.constant 0 : index
    %c0_0 = arith.constant 0 : index
    %0 = vector.load %arg2[%c0, %c0_0] : memref<1x512xf32, #tpu.memory_space<vmem>>, vector<1x512xf32>
    %c0_1 = arith.constant 0 : index
    %c0_2 = arith.constant 0 : index
    %1 = vector.load %arg3[%c0_1, %c0_2] : memref<1x512xf32, #tpu.memory_space<vmem>>, vector<1x512xf32>
    %2 = arith.mulf %0, %1 : vector<1x512xf32>
    %c0_3 = arith.constant 0 : index
    %c0_4 = arith.constant 0 : index
    %3 = vector.load %arg4[%c0_3, %c0_4] : memref<1x512xf32, #tpu.memory_space<vmem>>, vector<1x512xf32>
    tpu.vector_store %arg4[%c0_3, %c0_4], %2 {strides = array<i32>} : memref<1x512xf32, #tpu.memory_space<vmem>>, vector<1x512xf32>,
    return
  }
  func.func @transform_0(%arg0: i32, %arg1: i32) -> (i32, i32) {
    %c0_i32 = arith.constant 0 : i32
    return %arg1, %arg0 : i32, i32
  }
  func.func @transform_1(%arg0: i32, %arg1: i32) -> (i32, i32) {
    %c0_i32 = arith.constant 0 : i32
    %c0_i32_0 = arith.constant 0 : i32
    return %c0_i32, %arg0 : i32, i32
  }
  func.func @transform_2(%arg0: i32, %arg1: i32) -> (i32, i32) {
    %c0_i32 = arith.constant 0 : i32
    return %arg1, %arg0 : i32, i32
  }
}

</mosaic_0001>

<llo_original>
// kernel: tpu_custom_call.1
$region0: #{tpu_custom_call.1}
  #allocation0 [shape = 'u32[]', space=smem, size = 0x4, offset = 0x4, fixed_abs, tag = 'smem constant byte address 0x4 - core index']
  #allocation1 [shape = 'u32[144,128]{1,0:T(1,128)}', space=vmem, size = 0x12000, scoped, tag = 'internal scratch']
  %s0 = inlined_call_operand.hbm [shape: f32[1,512], index: 0, kind: input, shape index: {}]
  %s1 = inlined_call_operand.hbm [shape: f32[1,512], index: 1, kind: input, shape index: {}]
  %s2 = inlined_call_operand.hbm [shape: f32[1,512], index: 2, kind: output, shape index: {}]
  %s3 = sld [smem:[#allocation0]]
  $region26: #{tpu_custom_call.1} parent=0
    _
  %s5 = ssub.s32 1, %s3
  %s6 = scalar_select 0, %s5, %s3
  $region1: #{tpu_custom_call.1} parent=0
    #allocation2 [shape = 'u8[2048]{0}', space=vmem, size = 0x800, scoped, tag = 'input window, operand 0, single buffered']
    #allocation3 [shape = 's32[1]{0}', space=sflag, size = 0x4, scoped, tag = 'scoped memory for tpu_custom_call.1']
    #allocation4 [shape = 's32[1]{0}', space=sflag, size = 0x4, scoped, tag = 'scoped memory for tpu_custom_call.1']
    #allocation5 [shape = 'u8[2048]{0}', space=vmem, size = 0x800, scoped, tag = 'input window, operand 1, single buffered']
    #allocation6 [shape = 's32[1]{0}', space=sflag, size = 0x4, scoped, tag = 'scoped memory for tpu_custom_call.1']
    #allocation7 [shape = 'u8[2048]{0}', space=vmem, size = 0x800, scoped, tag = 'output window, operand 0, single buffered']
    %7 = vsyncpa [#allocation3], 0
    %8 = vsyncpa [#allocation6], 0
    %9 = vsyncpa [#allocation4], 0
    // Predicated region
    $region2: #{tpu_custom_call.1} parent=1 // pred_check
      _
    $region3: #{tpu_custom_call.1} parent=1 // pred_check_branch
      %11 = sbr.rel (0) target = $region5
    $region4: #{tpu_custom_call.1} parent=1 // pred_region
      %s13 = ssub.s32 64, 64
      %14 = vsyncadd [#allocation3], %s13
      %s16 = sshll.u32 [#allocation2], 4
      %s17 = int_to_ptr.vmem [resolvable:$true] %s16
      %19 = dma.hbm_to_vmem [thread:$0]  %s0, 64, %s17, [#allocation3]
    $region5: #{tpu_custom_call.1} parent=1 // pred_fallthru
      _
    // Predicated region
    $region6: #{tpu_custom_call.1} parent=1 // pred_check
      _
    $region7: #{tpu_custom_call.1} parent=1 // pred_check_branch
      %21 = sbr.rel (0) target = $region9
    $region8: #{tpu_custom_call.1} parent=1 // pred_region
      %s23 = ssub.s32 64, 64
      %24 = vsyncadd [#allocation6], %s23
      %s26 = sshll.u32 [#allocation5], 4
      %s27 = int_to_ptr.vmem [resolvable:$true] %s26
      %29 = dma.hbm_to_vmem [thread:$0]  %s1, 64, %s27, [#allocation6]
    $region9: #{tpu_custom_call.1} parent=1 // pred_fallthru
      _
    // Predicated region
    $region10: #{tpu_custom_call.1} parent=1 // pred_check
      _
    $region11: #{tpu_custom_call.1} parent=1 // pred_check_branch
      %31 = sbr.rel (0) target = $region13
    $region12: #{tpu_custom_call.1} parent=1 // pred_region
      %32 = dma.done [#allocation3], 64
    $region13: #{tpu_custom_call.1} parent=1 // pred_fallthru
      _
    // Predicated region
    $region14: #{tpu_custom_call.1} parent=1 // pred_check
      _
    $region15: #{tpu_custom_call.1} parent=1 // pred_check_branch
      %34 = sbr.rel (0) target = $region17
    $region16: #{tpu_custom_call.1} parent=1 // pred_region
      %35 = dma.done [#allocation6], 64
    $region17: #{tpu_custom_call.1} parent=1 // pred_fallthru
      _
    %v36 = vld [vmem:[#allocation2] sm:$0xf]
    %v37 = vld [vmem:[#allocation5] sm:$0xf]
    %v38 = vmul.f32 %v36, %v37
    %v39 = vlaneseq
    %vm40 = vcmp.ge.s32.totalorder %v39, 0
    %vm41 = vcmp.lt.s32.totalorder %v39, 512
    %vm42 = vmand %vm40, %vm41
    %43 = vst.msk [vmem:[#allocation7] sm:$0xf] %vm42, %v38
    // Predicated region
    $region18: #{tpu_custom_call.1} parent=1 // pred_check
      _
    $region19: #{tpu_custom_call.1} parent=1 // pred_check_branch
      %45 = sbr.rel (0) target = $region21
    $region20: #{tpu_custom_call.1} parent=1 // pred_region
      %s47 = ssub.s32 64, 64
      %48 = vsyncadd [#allocation4], %s47
      %s50 = sshll.u32 [#allocation7], 4
      %s51 = int_to_ptr.vmem [resolvable:$true] %s50
      %53 = dma.vmem_to_hbm [thread:$0]  %s51, 64, %s2, [#allocation4]
    $region21: #{tpu_custom_call.1} parent=1 // pred_fallthru
      _
    // Predicated region
    $region22: #{tpu_custom_call.1} parent=1 // pred_check
      _
    $region23: #{tpu_custom_call.1} parent=1 // pred_check_branch
      %55 = sbr.rel (0) target = $region25
    $region24: #{tpu_custom_call.1} parent=1 // pred_region
      %56 = dma.done [#allocation4], 64
    $region25: #{tpu_custom_call.1} parent=1 // pred_fallthru
      _
    %57 = vsyncpa [#allocation3], 1
    %58 = vsyncpa [#allocation6], 1
    %59 = vsyncpa [#allocation4], 1

</llo_original>
